<compile_context>
chip_gen: v6e
topology: v6e:2x2x1
jax: 0.10.0
libtpu: 0.0.40
codegen_flags: <defaults>
</compile_context>

<pallas_src>
import jax
import jax.numpy as jnp
from jax.experimental import pallas as pl
from jax.experimental.pallas import tpu as pltpu


def _focus_kernel(x_ref, w_ref, shift_ref, o_ref):
    # x_ref:     (1, K, tn)   space-to-depth pixels, rows on lanes (bf16/f32)
    # w_ref:     (C2, K)      1x1 conv weight with BN scale folded in
    # shift_ref: (C2, 1)      folded BN shift = beta - mean * scale   (f32)
    # o_ref:     (1, C2, tn)  output, rows on lanes
    y = jnp.dot(w_ref[...], x_ref[0], preferred_element_type=jnp.float32)
    y = y + shift_ref[...]                     # (C2, tn) + (C2, 1)
    # SiLU via a single EUP transcendental: sigmoid(y) = 0.5*(1 + tanh(y/2)).
    act = 0.5 * y * (1.0 + jnp.tanh(0.5 * y))
    o_ref[0] = act.astype(o_ref.dtype)


def focus_forward(x, conv_w, bn_gamma, bn_beta, bn_mean, bn_var,
                  eps=1e-5, tn=4096, use_bf16=True, out_dtype=jnp.float32):
    """Focus forward.

    x:       (N, C1, H, W)    float32, NCHW (matches PyTorch)
    conv_w:  (C2, 4*C1, 1, 1) conv weight (k=1, no bias)
    returns: (N, C2, H//2, W//2) in `out_dtype`, NCHW
    """
    N, C1, H, W = x.shape
    C2 = conv_w.shape[0]
    H2, W2 = H // 2, W // 2
    rp = H2 * W2                              # rows (= output pixels) per image

    # Row tile must be a multiple of 128 lanes when it is not the full dim.
    tn = max(128, (int(tn) // 128) * 128)

    # --- pad C1 so K = 4*C1 matches sublane packing (16 for bf16, 8 f32) ---
    group = 4 if use_bf16 else 2
    C1p = ((C1 + group - 1) // group) * group
    w4 = conv_w.reshape(C2, 4, C1)
    if C1p != C1:
        w4 = jnp.pad(w4, ((0, 0), (0, 0), (0, C1p - C1)))
        x = jnp.pad(x, ((0, 0), (0, C1p - C1), (0, 0), (0, 0)))
    K = 4 * C1p

    # --- space-to-depth + lane-dense layout in a single fused transpose ---
    # (N, C1p, H2, row_par, W2, col_par) -> (N, col_par, row_par, C1p, H2, W2)
    # Channel order k = (2*col_par + row_par)*C1p + c matches the PyTorch
    # torch.cat([ee, oe, eo, oo], dim=1) ordering.
    x6 = x.reshape(N, C1p, H2, 2, W2, 2)
    x_t = jnp.transpose(x6, (0, 5, 3, 1, 2, 4)).reshape(N, K, rp)

    # --- fold BN (inference) scale into the weight; keep only the shift ---
    scale = bn_gamma / jnp.sqrt(bn_var + eps)              # (C2,)
    w_mat = w4.reshape(C2, K) * scale[:, None]             # (C2, K)
    shift = (bn_beta - bn_mean * scale).reshape(C2, 1).astype(jnp.float32)

    if use_bf16:
        x_t = x_t.astype(jnp.bfloat16)
        w_mat = w_mat.astype(jnp.bfloat16)

    # --- lane tiling over rows: no pad / post-slice; ragged edge is masked ---
    if rp <= tn:
        tn_eff = rp                            # full dim is always a legal block
        if N == 1 and rp >= 256:
            # Split rows into >=2 blocks so both v7x TensorCores get work.
            tn_eff = ((pl.cdiv(rp, 2) + 127) // 128) * 128
    else:
        tn_eff = tn                            # multiple of 128
    grid = (N, pl.cdiv(rp, tn_eff))

    out = pl.pallas_call(
        _focus_kernel,
        out_shape=jax.ShapeDtypeStruct((N, C2, rp), out_dtype),
        grid_spec=pltpu.PrefetchScalarGridSpec(
            num_scalar_prefetch=0,
            grid=grid,
            in_specs=[
                pl.BlockSpec((1, K, tn_eff), lambda n, j: (n, 0, j)),
                pl.BlockSpec((C2, K), lambda n, j: (0, 0)),
                pl.BlockSpec((C2, 1), lambda n, j: (0, 0)),
            ],
            out_specs=pl.BlockSpec((1, C2, tn_eff), lambda n, j: (n, 0, j)),
        ),
        compiler_params=pltpu.CompilerParams(
            dimension_semantics=("parallel", "parallel"),
            # 48 MiB: below v7x's 64 MiB physical VMEM, ample on v5e/v6e.
            vmem_limit_bytes=48 * 1024 * 1024,
        ),
    )(x_t, w_mat, shift)

    # Rows are (h2, w2)-ordered per batch -> pure reshape, no transpose.
    return out.reshape(N, C2, H2, W2)


def focus_reference(x, conv_w, bn_gamma, bn_beta, bn_mean, bn_var,
                    eps=1e-5, use_bf16=True):
    """Pure-JAX reference (original concat formulation, same quantization)."""
    s2d = jnp.concatenate(
        [x[..., ::2, ::2], x[..., 1::2, ::2], x[..., ::2, 1::2], x[..., 1::2, 1::2]],
        axis=1,
    )
    C2, K = conv_w.shape[0], conv_w.shape[1]
    scale = bn_gamma / jnp.sqrt(bn_var + eps)
    w = conv_w.reshape(C2, K) * scale[:, None]
    shift = bn_beta - bn_mean * scale
    if use_bf16:
        s2d = s2d.astype(jnp.bfloat16)
        w = w.astype(jnp.bfloat16)
    y = jnp.einsum("nkhw,ck->nchw", s2d, w, preferred_element_type=jnp.float32)
    y = y + shift.reshape(1, C2, 1, 1)
    return y * jax.nn.sigmoid(y)


if __name__ == "__main__":
    key = jax.random.PRNGKey(0)
    N, C1, H, W = 2, 4, 16, 16
    C2 = 8
    K = 4 * C1

    k_x, k_w, k_g, k_b, k_m, k_v = jax.random.split(key, 6)
    x = jax.random.normal(k_x, (N, C1, H, W), dtype=jnp.float32)
    conv_w = jax.random.normal(k_w, (C2, K, 1, 1), dtype=jnp.float32) * 0.1
    bn_gamma = 1.0 + 0.1 * jax.random.normal(k_g, (C2,), dtype=jnp.float32)
    bn_beta = 0.1 * jax.random.normal(k_b, (C2,), dtype=jnp.float32)
    bn_mean = 0.05 * jax.random.normal(k_m, (C2,), dtype=jnp.float32)
    bn_var = jnp.abs(1.0 + 0.1 * jax.random.normal(k_v, (C2,), dtype=jnp.float32))

    ref = focus_reference(x, conv_w, bn_gamma, bn_beta, bn_mean, bn_var)

    # f32 output path (default).
    out = focus_forward(x, conv_w, bn_gamma, bn_beta, bn_mean, bn_var)
    out = jax.block_until_ready(out)
    assert out.shape == (N, C2, H // 2, W // 2), out.shape
    max_err = float(jnp.max(jnp.abs(out - ref)))
    # Tolerance covers bf16 matmul quantization (matched in the reference).
    assert jnp.allclose(out, ref, atol=2e-2, rtol=2e-2), max_err

    # bf16 output path (halved HBM writeback); looser tolerance for the store cast.
    out_bf16 = focus_forward(x, conv_w, bn_gamma, bn_beta, bn_mean, bn_var,
                             out_dtype=jnp.bfloat16)
    out_bf16 = jax.block_until_ready(out_bf16)
    assert out_bf16.dtype == jnp.bfloat16
    max_err_bf16 = float(jnp.max(jnp.abs(out_bf16.astype(jnp.float32) - ref)))
    assert jnp.allclose(out_bf16.astype(jnp.float32), ref,
                        atol=5e-2, rtol=5e-2), max_err_bf16

    print("KERNEL_OK")
</pallas_src>

<mosaic_0001>
module attributes {stable_mosaic.version = 11 : i64} {
  func.func @_focus_kernel(%arg0: i32, %arg1: i32, %arg2: memref<1x16x64xbf16, #tpu.memory_space<vmem>>, %arg3: memref<8x16xbf16, #tpu.memory_space<vmem>>, %arg4: memref<8x1xf32, #tpu.memory_space<vmem>>, %arg5: memref<1x8x64xf32, #tpu.memory_space<vmem>>) attributes {dimension_semantics = [#tpu.dimension_semantics<parallel>, #tpu.dimension_semantics<parallel>], iteration_bounds = array<i64: 2, 1>, scalar_prefetch = 0 : i64, scratch_operands = 0 : i64, tpu.core_type = #tpu.core_type<tc>, window_params = [{transform_indices = @transform_0, window_bounds = array<i64: 1, 16, 64>}, {pipeline_mode = #tpu.pipeline_mode<synchronous>, transform_indices = @transform_1, window_bounds = array<i64: 8, 16>}, {pipeline_mode = #tpu.pipeline_mode<synchronous>, transform_indices = @transform_2, window_bounds = array<i64: 8, 1>}, {transform_indices = @transform_3, window_bounds = array<i64: 1, 8, 64>}]} {
    %c0 = arith.constant 0 : index
    %c0_0 = arith.constant 0 : index
    %0 = vector.load %arg3[%c0, %c0_0] : memref<8x16xbf16, #tpu.memory_space<vmem>>, vector<8x16xbf16>
    %c0_1 = arith.constant 0 : index
    %c0_2 = arith.constant 0 : index
    %c0_3 = arith.constant 0 : index
    %1 = vector.load %arg2[%c0_1, %c0_2, %c0_3] : memref<1x16x64xbf16, #tpu.memory_space<vmem>>, vector<1x16x64xbf16>
    %2 = vector.shape_cast %1 : vector<1x16x64xbf16> to vector<16x64xbf16>
    %cst = arith.constant dense<0.000000e+00> : vector<8x64xf32>
    %3 = tpu.matmul %0, %2, %cst {dimension_numbers = #tpu.dot_dimension_numbers<[1], [0], [0], [1], [0, 0, 1, 1], [], []>} : vector<8x16xbf16>, vector<16x64xbf16>, vector<8x64xf32> -> vector<8x64xf32>
    %c0_4 = arith.constant 0 : index
    %c0_5 = arith.constant 0 : index
    %4 = vector.load %arg4[%c0_4, %c0_5] : memref<8x1xf32, #tpu.memory_space<vmem>>, vector<8x1xf32>
    %5 = vector.broadcast %4 : vector<8x1xf32> to vector<8x64xf32>
    %6 = arith.addf %3, %5 : vector<8x64xf32>
    %cst_6 = arith.constant 5.000000e-01 : f32
    %7 = vector.broadcast %cst_6 : f32 to vector<8x64xf32>
    %8 = arith.mulf %7, %6 : vector<8x64xf32>
    %cst_7 = arith.constant 5.000000e-01 : f32
    %9 = vector.broadcast %cst_7 : f32 to vector<8x64xf32>
    %10 = arith.mulf %9, %6 : vector<8x64xf32>
    %11 = math.tanh %10 : vector<8x64xf32>
    %cst_8 = arith.constant 1.000000e+00 : f32
    %12 = vector.broadcast %cst_8 : f32 to vector<8x64xf32>
    %13 = arith.addf %12, %11 : vector<8x64xf32>
    %14 = arith.mulf %8, %13 : vector<8x64xf32>
    %c0_9 = arith.constant 0 : index
    %c0_10 = arith.constant 0 : index
    %c0_11 = arith.constant 0 : index
    %15 = vector.load %arg5[%c0_9, %c0_10, %c0_11] : memref<1x8x64xf32, #tpu.memory_space<vmem>>, vector<1x8x64xf32>
    %16 = vector.shape_cast %15 : vector<1x8x64xf32> to vector<8x64xf32>
    %17 = vector.shape_cast %14 : vector<8x64xf32> to vector<1x8x64xf32>
    tpu.vector_store %arg5[%c0_9, %c0_10, %c0_11], %17 {strides = array<i32>} : memref<1x8x64xf32, #tpu.memory_space<vmem>>, vector<1x8x64xf32>,
    return
  }
  func.func @transform_0(%arg0: i32, %arg1: i32) -> (i32, i32, i32) {
    %c0_i32 = arith.constant 0 : i32
    %c0_i32_0 = arith.constant 0 : i32
    return %arg0, %c0_i32, %arg1 : i32, i32, i32
  }
  func.func @transform_1(%arg0: i32, %arg1: i32) -> (i32, i32) {
    %c0_i32 = arith.constant 0 : i32
    %c0_i32_0 = arith.constant 0 : i32
    %c0_i32_1 = arith.constant 0 : i32
    return %c0_i32, %c0_i32_0 : i32, i32
  }
  func.func @transform_2(%arg0: i32, %arg1: i32) -> (i32, i32) {
    %c0_i32 = arith.constant 0 : i32
    %c0_i32_0 = arith.constant 0 : i32
    %c0_i32_1 = arith.constant 0 : i32
    return %c0_i32, %c0_i32_0 : i32, i32
  }
  func.func @transform_3(%arg0: i32, %arg1: i32) -> (i32, i32, i32) {
    %c0_i32 = arith.constant 0 : i32
    %c0_i32_0 = arith.constant 0 : i32
    return %arg0, %c0_i32, %arg1 : i32, i32, i32
  }
}

</mosaic_0001>

<llo_original>
// kernel: tpu_custom_call.1
$region0: #{tpu_custom_call.1}
  #allocation0 [shape = 'u32[]', space=smem, size = 0x4, offset = 0x4, fixed_abs, tag = 'smem constant byte address 0x4 - core index']
  #allocation1 [shape = 'u32[144,128]{1,0:T(1,128)}', space=vmem, size = 0x12000, scoped, tag = 'internal scratch']
  %s0 = inlined_call_operand.hbm [shape: bf16[2,16,64], index: 0, kind: input, shape index: {}]
  %s1 = inlined_call_operand.vmem [shape: bf16[8,16], index: 1, kind: input, shape index: {}]
  %s2 = inlined_call_operand.vmem [shape: f32[8,1], index: 2, kind: input, shape index: {}]
  %s3 = inlined_call_operand.hbm [shape: f32[2,8,64], index: 3, kind: output, shape index: {}]
  %s4 = sld [smem:[#allocation0]]
  $region49: #{tpu_custom_call.1} parent=0
    _
  %s6 = ssub.s32 1, %s4
  %s7 = scalar_select 0, %s6, %s4
  $region1: #{tpu_custom_call.1} parent=0
    #allocation2 [shape = 'u8[8192]{0}', space=vmem, size = 0x2000, scoped, tag = 'input window, operand 0']
    #allocation3 [shape = 's32[2]{0}', space=sflag, size = 0x8, scoped, tag = 'scoped memory for tpu_custom_call.1']
    #allocation4 [shape = 's32[2]{0}', space=sflag, size = 0x8, scoped, tag = 'scoped memory for tpu_custom_call.1']
    #allocation5 [shape = 'u8[8192]{0}', space=vmem, size = 0x2000, scoped, tag = 'output window, operand 0']
    %8 = vsyncpa [#allocation3], 0
    %s9 = scalar_lea.sflag [#allocation3], 1
    %10 = vsyncpa %s9, 0
    %11 = vsyncpa [#allocation4], 0
    %s12 = scalar_lea.sflag [#allocation4], 1
    %13 = vsyncpa %s12, 0
    loop: start=0, step=1, limit=4
    $region2: #{tpu_custom_call.1} parent=1 // loop_pre_header
      _
    $region3: #{tpu_custom_call.1} parent=1 // loop_header
      %s15 = sphi 0, %s19
      %p16 = scmp.ge.s32.totalorder %s15, 4
      %s22 = sphi 0, %s34
      %s23 = sphi 0, %s30
      %s24 = sphi 0, %s22
      %s25 = sphi 0, %s23
      %s26 = sphi 0, %s24
      %s27 = sphi 0, %s25
      %s39 = sphi 0, %s41
      %s42 = sphi 0, %s39
      %s43 = sphi 0, %s42
      %s59 = sphi 0, %s43
      %s63 = sphi 0, %s63
      %s65 = sphi 0, %s63
      %s66 = sphi 0, %s65
      %s80 = sphi 0, %s66
      %s84 = sphi 0, %s84
      %s86 = sphi 0, %s84
      %s87 = sphi 0, %s86
      %s101 = sphi 0, %s87
      %s109 = sphi 0, %s111
      %s112 = sphi 0, %s109
      %s113 = sphi 0, %s112
      %s129 = sphi 0, %s113
    $region4: #{tpu_custom_call.1} parent=1 // loop_header_branch
      %18 = sbr.rel (%p16) target = $region8
    $region5: #{tpu_custom_call.1} parent=1 // loop_body
      %s20 = ssub.s32 %s15, 1
      %s21 = ssub.s32 %s15, 2
      %s28 = sadd.s32 1, %s23
      %p29 = scmp.ge.s32.totalorder %s28, 1
      %s30 = scalar_select %p29, 0, %s28
      %s31 = sadd.s32 1, %s22
      %s32 = scalar_select %p29, %s31, %s22
      %p33 = scmp.ge.s32.totalorder %s32, 2
      %s34 = scalar_select %p33, 0, %s32
      %s35 = ssub.s32 %s22, %s34
      %s36 = ssub.s32 %s23, %s30
      %s37 = sor.u32 %s35, %s36
      %p38 = scmp.eq.s32.totalorder %s37, 0
      %s40 = sadd.s32 %s39, 1
      %s41 = scalar_select %p38, %s39, %s40
      %p44 = pneg %p38
      %p45 = scmp.eq.s32.totalorder %s15, 1
      %p46 = por %p44, %p45
      %p47 = scmp.ne.s32.totalorder %s39, %s42
      %p48 = scmp.eq.s32.totalorder %s15, 0
      %p49 = por %p47, %p48
      %p50 = scmp.ne.s32.totalorder %s39, %s42
      %p51 = scmp.eq.s32.totalorder %s20, 1
      %p52 = por %p50, %p51
      %p53 = scmp.ne.s32.totalorder %s42, %s43
      %p54 = scmp.eq.s32.totalorder %s20, 0
      %p55 = por %p53, %p54
      %p56 = scmp.ne.s32.totalorder %s42, %s43
      %p57 = scmp.eq.s32.totalorder %s21, 1
      %p58 = por %p56, %p57
      %p60 = scmp.ne.s32.totalorder %s43, %s59
      %p61 = scmp.eq.s32.totalorder %s21, 0
      %p62 = por %p60, %p61
      %s64 = sadd.s32 %s63, 1
      %p67 = scmp.eq.s32.totalorder %s15, 1
      %p68 = scmp.ne.s32.totalorder %s63, %s65
      %p69 = scmp.eq.s32.totalorder %s15, 0
      %p70 = por %p68, %p69
      %p71 = scmp.ne.s32.totalorder %s63, %s65
      %p72 = scmp.eq.s32.totalorder %s20, 1
      %p73 = por %p71, %p72
      %p74 = scmp.ne.s32.totalorder %s65, %s66
      %p75 = scmp.eq.s32.totalorder %s20, 0
      %p76 = por %p74, %p75
      %p77 = scmp.ne.s32.totalorder %s65, %s66
      %p78 = scmp.eq.s32.totalorder %s21, 1
      %p79 = por %p77, %p78
      %p81 = scmp.ne.s32.totalorder %s66, %s80
      %p82 = scmp.eq.s32.totalorder %s21, 0
      %p83 = por %p81, %p82
      %s85 = sadd.s32 %s84, 1
      %p88 = scmp.eq.s32.totalorder %s15, 1
      %p89 = scmp.ne.s32.totalorder %s84, %s86
      %p90 = scmp.eq.s32.totalorder %s15, 0
      %p91 = por %p89, %p90
      %p92 = scmp.ne.s32.totalorder %s84, %s86
      %p93 = scmp.eq.s32.totalorder %s20, 1
      %p94 = por %p92, %p93
      %p95 = scmp.ne.s32.totalorder %s86, %s87
      %p96 = scmp.eq.s32.totalorder %s20, 0
      %p97 = por %p95, %p96
      %p98 = scmp.ne.s32.totalorder %s86, %s87
      %p99 = scmp.eq.s32.totalorder %s21, 1
      %p100 = por %p98, %p99
      %p102 = scmp.ne.s32.totalorder %s87, %s101
      %p103 = scmp.eq.s32.totalorder %s21, 0
      %p104 = por %p102, %p103
      %s105 = ssub.s32 %s22, %s34
      %s106 = ssub.s32 %s23, %s30
      %s107 = sor.u32 %s105, %s106
      %p108 = scmp.eq.s32.totalorder %s107, 0
      %s110 = sadd.s32 %s109, 1
      %s111 = scalar_select %p108, %s109, %s110
      %p114 = pneg %p108
      %p115 = scmp.eq.s32.totalorder %s15, 1
      %p116 = por %p114, %p115
      %p117 = scmp.ne.s32.totalorder %s109, %s112
      %p118 = scmp.eq.s32.totalorder %s15, 0
      %p119 = por %p117, %p118
      %p120 = scmp.ne.s32.totalorder %s109, %s112
      %p121 = scmp.eq.s32.totalorder %s20, 1
      %p122 = por %p120, %p121
      %p123 = scmp.ne.s32.totalorder %s112, %s113
      %p124 = scmp.eq.s32.totalorder %s20, 0
      %p125 = por %p123, %p124
      %p126 = scmp.ne.s32.totalorder %s112, %s113
      %p127 = scmp.eq.s32.totalorder %s21, 1
      %p128 = por %p126, %p127
      %p130 = scmp.ne.s32.totalorder %s113, %s129
      %p131 = scmp.eq.s32.totalorder %s21, 0
      %p132 = por %p130, %p131
      %p133 = scmp.le.s32.totalorder 1, %s15
      %p134 = scmp.lt.s32.totalorder %s15, 3
      %p135 = pnand %p133, %p134
      %p136 = pneg %p135
      // Predicated region
      $region9: #{tpu_custom_call.1} parent=5 // pred_check
        _
      $region10: #{tpu_custom_call.1} parent=5 // pred_check_branch
        %138 = sbr.rel (%p135) target = $region12
      $region11: #{tpu_custom_call.1} parent=5 // pred_region
        %s139 = ssub.s32 %s15, 1
        // Predicated region
        $region13: #{tpu_custom_call.1} parent=11 // pred_check
          %p140 = pneg %p76
        $region14: #{tpu_custom_call.1} parent=11 // pred_check_branch
          %142 = sbr.rel (%p140) target = $region16
        $region15: #{tpu_custom_call.1} parent=11 // pred_region
          _
        $region16: #{tpu_custom_call.1} parent=11 // pred_fallthru
          _
        // Predicated region
        $region17: #{tpu_custom_call.1} parent=11 // pred_check
          %p143 = pneg %p97
        $region18: #{tpu_custom_call.1} parent=11 // pred_check_branch
          %145 = sbr.rel (%p143) target = $region20
        $region19: #{tpu_custom_call.1} parent=11 // pred_region
          _
        $region20: #{tpu_custom_call.1} parent=11 // pred_fallthru
          _
      $region12: #{tpu_custom_call.1} parent=5 // pred_fallthru
        _
      %p146 = scmp.lt.s32.totalorder %s15, 2
      // Predicated region
      $region21: #{tpu_custom_call.1} parent=5 // pred_check
        %p147 = pneg %p146
      $region22: #{tpu_custom_call.1} parent=5 // pred_check_branch
        %149 = sbr.rel (%p147) target = $region24
      $region23: #{tpu_custom_call.1} parent=5 // pred_region
        // Predicated region
        $region25: #{tpu_custom_call.1} parent=23 // pred_check
          %p150 = pneg %p49
        $region26: #{tpu_custom_call.1} parent=23 // pred_check_branch
          %152 = sbr.rel (%p150) target = $region28
        $region27: #{tpu_custom_call.1} parent=23 // pred_region
          %s153 = sand.u32 %s39, 1
          %s154 = scalar_lea.sflag [#allocation3], %s153
          %s155 = sand.u32 %s39, 1
          %s156 = smul.addr %s155, 8
          %s157 = scalar_lea.vmem [#allocation2], %s156
          %s159 = ssub.s32 128, 128
          %160 = vsyncadd %s154, %s159
          %s161 = smul.addr %s22, 2
          %s162 = sadd.s32 %s23, %s161
          %s163 = smul.addr %s162, 64
          %s164 = scalar_lea.hbm %s0, %s163
          %s165 = sshll.u32 %s157, 4
          %s166 = int_to_ptr.vmem [resolvable:$true] %s165
          %171 = dma.hbm_to_vmem [thread:$0]  %s164, 128, %s166, %s154, 64, 64, 4
        $region28: #{tpu_custom_call.1} parent=23 // pred_fallthru
          _
      $region24: #{tpu_custom_call.1} parent=5 // pred_fallthru
        _
      %p172 = scmp.le.s32.totalorder 1, %s15
      %p173 = scmp.lt.s32.totalorder %s15, 3
      %p174 = pnand %p172, %p173
      %p175 = pneg %p174
      // Predicated region
      $region29: #{tpu_custom_call.1} parent=5 // pred_check
        _
      $region30: #{tpu_custom_call.1} parent=5 // pred_check_branch
        %177 = sbr.rel (%p174) target = $region32
      $region31: #{tpu_custom_call.1} parent=5 // pred_region
        %s178 = ssub.s32 %s15, 1
        %s179 = sand.u32 %s42, 1
        %s180 = scalar_lea.sflag [#allocation3], %s179
        %s181 = sand.u32 %s42, 1
        %s182 = smul.addr %s181, 8
        %s183 = scalar_lea.vmem [#allocation2], %s182
        // Predicated region
        $region33: #{tpu_custom_call.1} parent=31 // pred_check
          %p184 = pneg %p55
        $region34: #{tpu_custom_call.1} parent=31 // pred_check_branch
          %186 = sbr.rel (%p184) target = $region36
        $region35: #{tpu_custom_call.1} parent=31 // pred_region
          %187 = dma.done %s180, 128
        $region36: #{tpu_custom_call.1} parent=31 // pred_fallthru
          _
        %s188 = sand.u32 %s42, 1
        %s189 = scalar_lea.sflag [#allocation3], %s188
        %s190 = sand.u32 %s42, 1
        %s191 = smul.addr %s190, 8
        %s192 = scalar_lea.vmem [#allocation2], %s191
        %p193 = pneg %p55
        %p194 = pneg %p52
        %p195 = pneg %p76
        %p196 = pneg %p73
        %p197 = pneg %p97
        %p198 = pneg %p94
        %p199 = pneg %p125
        %p200 = pneg %p122
        %s201 = sand.u32 %s112, 1
        %s202 = scalar_lea.sflag [#allocation4], %s201
        %s203 = sand.u32 %s112, 1
        %s204 = smul.addr %s203, 8
        %s205 = scalar_lea.vmem [#allocation5], %s204
        %v207 = vld [vmem:[%s1] sm:$0xf]
        %v208 = vld [vmem:[%s183] sm:$0xf]
        %v209 = vld [vmem:[%s183 + $0x4] sm:$0xf]
        %v210 = vld [vmem:[%s2] sm:$0xff]
        %212 = vset.pattern.permute.xlu0 0
        %213 = vperm.xlu0 %212, %v210
        %v214 = vpop.permute.xlu0 %213
        %v218 = vunpack.c.l.b16 %v208
        %v219 = vunpack.c.l.b16 %v209
        %v220 = vpack.c.b16 %v219, %v218
        %vm222 = vcmask 130048
        %v224 = vsel %vm222, %v207, 0
        %226 = vmatprep.subr.bf16.mxu0 0
        %227 = vmatpush1.bf16.msra.mxu0 0
        %228 = vmatprep.subr.bf16.mxu0 0
        %229 = vmatpush1.bf16.msra.mxu0 0
        %230 = vmatprep.subr.bf16.mxu0 0
        %231 = vmatpush1.bf16.msra.mxu0 0
        %232 = vmatprep.subr.bf16.mxu0 0
        %233 = vmatpush1.bf16.msra.mxu0 0
        %234 = vmatprep.subr.bf16.mxu0 0
        %235 = vmatpush1.bf16.msra.mxu0 0
        %236 = vmatprep.subr.bf16.mxu0 0
        %237 = vmatpush1.bf16.msra.mxu0 0
        %238 = vmatprep.subr.bf16.mxu0 0
        %239 = vmatpush1.bf16.msra.mxu0 0
        %240 = vmatprep.subr.bf16.mxu0 0
        %241 = vmatpush1.bf16.msra.mxu0 %v220
        %242 = vmatprep.subr.bf16.mxu0 0
        %243 = vmatpush2.bf16.msra.mxu0 0
        %244 = vmatprep.subr.bf16.mxu0 0
        %245 = vmatpush2.bf16.msra.mxu0 0
        %246 = vmatprep.subr.bf16.mxu0 0
        %247 = vmatpush2.bf16.msra.mxu0 0
        %248 = vmatprep.subr.bf16.mxu0 0
        %249 = vmatpush2.bf16.msra.mxu0 0
        %250 = vmatprep.subr.bf16.mxu0 0
        %251 = vmatpush2.bf16.msra.mxu0 0
        %252 = vmatprep.subr.bf16.mxu0 0
        %253 = vmatpush2.bf16.msra.mxu0 0
        %254 = vmatprep.subr.bf16.mxu0 0
        %255 = vmatpush2.bf16.msra.mxu0 0
        %256 = vmatprep.subr.bf16.mxu0 0
        %257 = vmatpush2.bf16.msra.mxu0 0
        %258 = vmatprep.mubr.bf16.mxu0 0
        %259 = vmatmul.mubr.bf16.gmra.mxu0 %v224
        %v260 = vpop.f32.mrf.mxu0
        %v261 = vadd.f32 %v214, %v260
        %v262 = vpop.f32.mrf.mxu0
        %v263 = vpop.f32.mrf.mxu0
        %v264 = vpop.f32.mrf.mxu0
        %265 = vdwg.mxu0
        %v266 = vmul.f32 %v261, 0.5
        %v267 = vtanh.pop %v266
        %v268 = vadd.f32 %v267, 1.0
        %v269 = vmul.f32 %v266, %v268
        %vm270 = vcmask 523264
        %271 = vst.msk [vmem:[%s205] sm:$0xff] %vm270, %v269
        %s272 = sand.u32 %s112, 1
        %s273 = scalar_lea.sflag [#allocation4], %s272
        %s274 = sand.u32 %s112, 1
        %s275 = smul.addr %s274, 8
        %s276 = scalar_lea.vmem [#allocation5], %s275
        // Predicated region
        $region37: #{tpu_custom_call.1} parent=31 // pred_check
          %p277 = pneg %p122
        $region38: #{tpu_custom_call.1} parent=31 // pred_check_branch
          %279 = sbr.rel (%p277) target = $region40
        $region39: #{tpu_custom_call.1} parent=31 // pred_region
          %s281 = ssub.s32 128, 128
          %282 = vsyncadd %s273, %s281
          %s283 = sadd.s32 %s25, %s24
          %s284 = smul.addr %s283, 128
          %s285 = scalar_lea.hbm %s3, %s284
          %s287 = sshll.u32 %s276, 4
          %s288 = int_to_ptr.vmem [resolvable:$true] %s287
          %290 = dma.vmem_to_hbm [thread:$0]  %s288, 128, %s285, %s273
        $region40: #{tpu_custom_call.1} parent=31 // pred_fallthru
          _
      $region32: #{tpu_custom_call.1} parent=5 // pred_fallthru
        _
      %p291 = scmp.le.s32.totalorder 2, %s15
      // Predicated region
      $region41: #{tpu_custom_call.1} parent=5 // pred_check
        %p292 = pneg %p291
      $region42: #{tpu_custom_call.1} parent=5 // pred_check_branch
        %294 = sbr.rel (%p292) target = $region44
      $region43: #{tpu_custom_call.1} parent=5 // pred_region
        %s295 = ssub.s32 %s15, 2
        // Predicated region
        $region45: #{tpu_custom_call.1} parent=43 // pred_check
          %p296 = pneg %p128
        $region46: #{tpu_custom_call.1} parent=43 // pred_check_branch
          %298 = sbr.rel (%p296) target = $region48
        $region47: #{tpu_custom_call.1} parent=43 // pred_region
          %s299 = sand.u32 %s113, 1
          %s300 = scalar_lea.sflag [#allocation4], %s299
          %s301 = sand.u32 %s113, 1
          %s302 = smul.addr %s301, 8
          %s303 = scalar_lea.vmem [#allocation5], %s302
          %304 = dma.done %s300, 128
        $region48: #{tpu_custom_call.1} parent=43 // pred_fallthru
          _
      $region44: #{tpu_custom_call.1} parent=5 // pred_fallthru
        _
    $region6: #{tpu_custom_call.1} parent=1 // loop_footer
      %s19 = sadd.s32 1, %s15
    $region7: #{tpu_custom_call.1} parent=1 // loop_footer_branch
      %14 = sbr.rel target = $region3
    $region8: #{tpu_custom_call.1} parent=1 // loop_exit
      _
    %305 = vsyncpa [#allocation3], 1
    %s306 = scalar_lea.sflag [#allocation3], 1
    %307 = vsyncpa %s306, 1
    %308 = vsyncpa [#allocation4], 1
    %s309 = scalar_lea.sflag [#allocation4], 1
    %310 = vsyncpa %s309, 1

</llo_original>
